<compile_context>
chip_gen: v7x
topology: tpu7x:2x2x1
jax: 0.10.0
libtpu: 0.0.40
codegen_flags: <defaults>
</compile_context>

<pallas_src>
import functools

import jax
import jax.numpy as jnp
from jax.experimental import pallas as pl
from jax.experimental.pallas import tpu as pltpu

_LANE = 128
_SUBLANE_BF16 = 16                        # bf16 packs 16 rows per sublane group
_DEFAULT_VMEM_BYTES = 64 * 1024 * 1024    # v7x floor; used if the query fails
_VMEM_HEADROOM = 8 * 1024 * 1024          # compiler-internal scratch headroom


def _round_up(x, m):
    return ((x + m - 1) // m) * m


def _usable_vmem_bytes():
    """Per-generation VMEM budget: physical capacity minus fixed headroom."""
    try:
        cap = int(pltpu.get_tpu_info().vmem_capacity_bytes)
    except Exception:           # conservative fallback (v7x-sized)
        cap = _DEFAULT_VMEM_BYTES
    return max(cap - _VMEM_HEADROOM, 16 * 1024 * 1024)


# ----------------------------------------------------------------------------
# Kernel
# ----------------------------------------------------------------------------
def _projector_kernel(x_ref, w1_ref, b1_ref, w2_ref, b2_ref, o_ref, h_ref, *, kn):
    """Fused Linear -> ReLU -> Linear on one (token tile, out-feature tile).

    Grid = (M_pad // tm, Ht_pad // tn_eff), j (out features) innermost and
    marked "arbitrary": for each token tile i the hidden intermediate
    h = relu(x @ W1 + b1) is computed once (at j == 0) into the bf16 VMEM
    scratch `h_ref` and reused for every output-feature tile j.

    x_ref:  (tm, Hs)        bf16 student hidden states tile
    w1_ref: (Hs, Hmid_pad)  bf16 first Linear weight (in x out), resident
    b1_ref: (1, Hmid_pad)   f32 first Linear bias
    w2_ref: (Hmid_pad, tn)  bf16 second Linear weight tile (or full W2)
    b2_ref: (1, tn)         f32 second Linear bias tile
    o_ref:  (tm, tn)        output tile in the activation dtype
    h_ref:  (tm, Hmid_pad)  bf16 VMEM scratch for the ReLU intermediate
                            (bf16 h is an intentional precision trade-off).
    """
    j = pl.program_id(1)

    @pl.when(j == 0)
    def _():
        x = x_ref[...]                                   # (tm, Hs) bf16
        hmid = h_ref.shape[1]
        if hmid == kn:
            acc = jnp.dot(x, w1_ref[...], preferred_element_type=jnp.float32)
            h_ref[...] = jnp.maximum(acc + b1_ref[...], 0.0).astype(h_ref.dtype)
        else:
            # Chunk H_mid with *static* slice starts: each chunk's f32
            # accumulator is retired by its store to h_ref, so the live f32
            # intermediate stays (tm, kn) instead of (tm, Hmid_pad).
            # TODO(synk): a lax.fori_loop with dynamic lane-dim starts would
            # give the scheduler explicit live-range boundaries, but static
            # slices lower more robustly in Mosaic, so the loop stays static.
            for c in range(0, hmid, kn):
                acc = jnp.dot(x, w1_ref[:, c:c + kn],
                              preferred_element_type=jnp.float32)
                acc = jnp.maximum(acc + b1_ref[:, c:c + kn], 0.0)
                h_ref[:, c:c + kn] = acc.astype(h_ref.dtype)

    y = jnp.dot(h_ref[...], w2_ref[...], preferred_element_type=jnp.float32)
    o_ref[...] = (y + b2_ref[...]).astype(o_ref.dtype)


# ----------------------------------------------------------------------------
# One-time weight preparation (projector load time)
# ----------------------------------------------------------------------------
def prepare_projector(w1, b1, w2, b2):
    """Pad + cast projector weights once.

    w1: (H_s, H_mid), b1: (H_mid,), w2: (H_mid, H_t), b2: (H_t,)
    (weights stored (in, out), i.e. nn.Linear.weight.T)
    Returns (padded_params, meta) with bf16 weights / f32 biases.
    """
    Hs, Hmid = w1.shape
    Hmid2, Ht = w2.shape
    assert Hmid2 == Hmid and b1.shape == (Hmid,) and b2.shape == (Ht,)

    # Fixed 512-wide tiles (multiple of the 256-wide v6e/v7x MXU), padded up
    # rather than gcd-shrunk, so awkward widths never shrink the MXU N dim.
    kn = min(4 * _LANE, _round_up(Hmid, _LANE))
    tn = min(4 * _LANE, _round_up(Ht, _LANE))
    Hmid_pad = _round_up(Hmid, kn)
    Ht_pad = _round_up(Ht, tn)

    w1p = jnp.pad(w1, ((0, 0), (0, Hmid_pad - Hmid))).astype(jnp.bfloat16)
    b1p = jnp.pad(b1, (0, Hmid_pad - Hmid)).reshape(1, Hmid_pad).astype(jnp.float32)
    w2p = jnp.pad(w2, ((0, Hmid_pad - Hmid), (0, Ht_pad - Ht))).astype(jnp.bfloat16)
    b2p = jnp.pad(b2, (0, Ht_pad - Ht)).reshape(1, Ht_pad).astype(jnp.float32)

    meta = dict(hs=Hs, hmid=Hmid, ht=Ht, kn=kn, tn=tn)
    return (w1p, b1p, w2p, b2p), meta


# ----------------------------------------------------------------------------
# Forward
# ----------------------------------------------------------------------------
@functools.partial(
    jax.jit,
    static_argnames=("ht", "kn", "tn", "tm", "force_tiled_w2", "single_buffer"))
def _projector_apply(x2d, w1p, b1p, w2p, b2p, *, ht, kn, tn, tm,
                     force_tiled_w2=False, single_buffer=True):
    M, Hs = x2d.shape
    Hmid_pad = w1p.shape[1]
    Ht_pad = w2p.shape[1]
    assert w1p.shape[0] == Hs and w2p.shape[0] == Hmid_pad
    out_dtype = x2d.dtype
    out_bytes = jnp.dtype(out_dtype).itemsize

    # ---- token tile (multiple of 16 rows for bf16 packing) -----------------
    tm = max(_SUBLANE_BF16,
             _round_up(min(tm, _round_up(M, _SUBLANE_BF16)), _SUBLANE_BF16))

    usable = _usable_vmem_bytes()
    budget = (9 * usable) // 10            # keep margin under the scoped limit
    const_bufs = 1 if single_buffer else 2

    # NOTE: W1 is kept fully resident along H_mid, which is fine for the
    # BERT<->Mistral projector sizes this module builds (<= ~13 MB bf16).
    def vmem_need(tm_, tn_, w2_bufs_):
        return (2 * tm_ * max(Hs, _LANE) * 2          # x tile (bf16, 2 bufs)
                + const_bufs * Hs * Hmid_pad * 2      # W1 (bf16)
                + const_bufs * 8 * Hmid_pad * 4       # b1 (f32, sublane-padded)
                + w2_bufs_ * Hmid_pad * tn_ * 2       # W2 tile (bf16)
                + w2_bufs_ * 8 * max(tn_, _LANE) * 4  # b2 tile (f32)
                + 2 * tm_ * tn_ * out_bytes           # out tile (2 bufs)
                + tm_ * Hmid_pad * 2                  # h scratch (bf16)
                + tm_ * kn * 4)                       # live f32 chunk of x@W1

    # ---- prefer W2 fully resident (DMA'd exactly once) ---------------------
    tm_res = tm
    while tm_res > 128 and vmem_need(tm_res, Ht_pad, const_bufs) > budget:
        tm_res = max(128, _round_up(tm_res // 2, _SUBLANE_BF16))
    if (not force_tiled_w2) and vmem_need(tm_res, Ht_pad, const_bufs) <= budget:
        tm, tn_eff, w2_resident = tm_res, Ht_pad, True
    else:
        tn_eff, w2_resident = tn, False
        while tm > _SUBLANE_BF16 and vmem_need(tm, tn_eff, 2) > budget:
            tm = max(_SUBLANE_BF16, _round_up(tm // 2, _SUBLANE_BF16))

    M_pad = _round_up(M, tm)
    n_i = M_pad // tm
    n_j = Ht_pad // tn_eff
    grid = (n_i, n_j)
    # TODO(synk): on v7x, when n_i collapses to 1 for mid-sized M, halving tm
    # to keep 2 token tiles would let megacore use both TensorCores.

    # Per-call activation prep only (weights were prepared once).
    x = jnp.pad(x2d, ((0, M_pad - M), (0, 0))).astype(jnp.bfloat16)

    def const_spec(shape, index_map):
        if single_buffer:
            return pl.BlockSpec(shape, index_map, pipeline_mode=pl.Buffered(1))
        return pl.BlockSpec(shape, index_map)

    w1_spec = const_spec((Hs, Hmid_pad), lambda i, j: (0, 0))
    b1_spec = const_spec((1, Hmid_pad), lambda i, j: (0, 0))
    if w2_resident:
        w2_spec = const_spec((Hmid_pad, tn_eff), lambda i, j: (0, j))
        b2_spec = const_spec((1, tn_eff), lambda i, j: (0, j))
    else:
        w2_spec = pl.BlockSpec((Hmid_pad, tn_eff), lambda i, j: (0, j))
        b2_spec = pl.BlockSpec((1, tn_eff), lambda i, j: (0, j))

    flops = 2 * M_pad * Hmid_pad * (Hs + Ht_pad)
    w2_streams = 1 if n_j == 1 else n_i      # W2 re-streamed once per token tile
    bytes_accessed = (x.size * 2 + w1p.size * 2 + b1p.size * 4
                      + w2_streams * (w2p.size * 2 + b2p.size * 4)
                      + M_pad * Ht_pad * out_bytes)

    out = pl.pallas_call(
        functools.partial(_projector_kernel, kn=kn),
        out_shape=jax.ShapeDtypeStruct((M_pad, Ht_pad), out_dtype),
        grid_spec=pltpu.PrefetchScalarGridSpec(
            num_scalar_prefetch=0,
            grid=grid,
            in_specs=[
                pl.BlockSpec((tm, Hs), lambda i, j: (i, 0)),   # x token tile
                w1_spec, b1_spec, w2_spec, b2_spec,
            ],
            out_specs=pl.BlockSpec((tm, tn_eff), lambda i, j: (i, j)),
            scratch_shapes=[pltpu.VMEM((tm, Hmid_pad), jnp.bfloat16)],
        ),
        compiler_params=pltpu.CompilerParams(
            # i (tokens) independent -> parallel (megacore); j carries the
            # h-scratch reuse for a given i -> must stay sequential/arbitrary
            # and innermost.
            dimension_semantics=("parallel", "arbitrary"),
            vmem_limit_bytes=int(usable),
        ),
        cost_estimate=pl.CostEstimate(
            flops=flops, transcendentals=0, bytes_accessed=int(bytes_accessed)),
    )(x, w1p, b1p, w2p, b2p)

    return out[:M, :ht]


def projector_forward(hidden_states, proj_params, proj_meta, *, tm=512,
                      force_tiled_w2=False):
    """Apply the distiller projector: relu(x @ W1 + b1) @ W2 + b2.

    hidden_states: (B, S, H_s); proj_params/proj_meta from prepare_projector.
    Returns (B, S, H_t) in hidden_states.dtype.
    """
    B, S, Hs = hidden_states.shape
    assert Hs == proj_meta["hs"]
    w1p, b1p, w2p, b2p = proj_params
    x2d = hidden_states.reshape(B * S, Hs)
    kwargs = dict(ht=proj_meta["ht"], kn=proj_meta["kn"], tn=proj_meta["tn"],
                  tm=tm, force_tiled_w2=force_tiled_w2)
    try:
        out2d = _projector_apply(x2d, w1p, b1p, w2p, b2p,
                                 single_buffer=True, **kwargs)
    except Exception:
        # pl.Buffered(1) unsupported on this JAX build: fall back to default
        # double-buffered constant-index operands (same HBM traffic, larger
        # VMEM footprint).
        out2d = _projector_apply(x2d, w1p, b1p, w2p, b2p,
                                 single_buffer=False, **kwargs)
    return out2d.reshape(B, S, proj_meta["ht"])


# ----------------------------------------------------------------------------
# Reference (matches the kernel's intentional bf16 quantization points)
# ----------------------------------------------------------------------------
def _reference_forward(x, w1, b1, w2, b2):
    xb = x.astype(jnp.bfloat16).astype(jnp.float32)
    w1b = w1.astype(jnp.bfloat16).astype(jnp.float32)
    w2b = w2.astype(jnp.bfloat16).astype(jnp.float32)
    h = jnp.maximum(xb @ w1b + b1, 0.0)
    h = h.astype(jnp.bfloat16).astype(jnp.float32)     # kernel keeps h in bf16
    return h @ w2b + b2


if __name__ == "__main__":
    key = jax.random.PRNGKey(0)

    # ---- Test 1: projector structure "s-2t-relu-t" at small sizes ----------
    #   student hidden H_s = 32, mid = 2 * teacher hidden = 128, teacher = 64
    B, S = 2, 8
    H_s, H_t = 32, 64
    H_mid = 2 * H_t

    k_x, k_w1, k_b1, k_w2, k_b2, k2 = jax.random.split(key, 6)
    hidden_states = jax.random.normal(k_x, (B, S, H_s), dtype=jnp.float32)
    w1 = jax.random.normal(k_w1, (H_s, H_mid), dtype=jnp.float32) * (H_s ** -0.5)
    b1 = jax.random.normal(k_b1, (H_mid,), dtype=jnp.float32) * 0.01
    w2 = jax.random.normal(k_w2, (H_mid, H_t), dtype=jnp.float32) * (H_mid ** -0.5)
    b2 = jax.random.normal(k_b2, (H_t,), dtype=jnp.float32) * 0.01

    params, meta = prepare_projector(w1, b1, w2, b2)
    out = projector_forward(hidden_states, params, meta)
    out = jax.block_until_ready(out)
    ref = _reference_forward(hidden_states, w1, b1, w2, b2)
    assert out.shape == (B, S, H_t)
    assert jnp.allclose(out, ref, atol=2e-2, rtol=2e-2), "test1 mismatch"

    # ---- Test 2: exercise H_mid chunking, H_t tiling, multi token tiles ----
    B2, S2 = 2, 24
    H_s2, H_mid2, H_t2 = 32, 1024, 640        # kn=512 (2 chunks), Ht_pad=1024
    k_x, k_w1, k_b1, k_w2, k_b2 = jax.random.split(k2, 5)
    hs2 = jax.random.normal(k_x, (B2, S2, H_s2), dtype=jnp.float32)
    w1b = jax.random.normal(k_w1, (H_s2, H_mid2), dtype=jnp.float32) * (H_s2 ** -0.5)
    b1b = jax.random.normal(k_b1, (H_mid2,), dtype=jnp.float32) * 0.01
    w2b = jax.random.normal(k_w2, (H_mid2, H_t2), dtype=jnp.float32) * (H_mid2 ** -0.5)
    b2b = jax.random.normal(k_b2, (H_t2,), dtype=jnp.float32) * 0.01

    params2, meta2 = prepare_projector(w1b, b1b, w2b, b2b)
    out2 = projector_forward(hs2, params2, meta2, tm=16, force_tiled_w2=True)
    out2 = jax.block_until_ready(out2)
    ref2 = _reference_forward(hs2, w1b, b1b, w2b, b2b)
    assert out2.shape == (B2, S2, H_t2)
    assert jnp.allclose(out2, ref2, atol=2e-2, rtol=2e-2), "test2 mismatch"

    print("KERNEL_OK")
</pallas_src>

<mosaic_0001>
module attributes {stable_mosaic.version = 11 : i64} {
  func.func @_projector_kernel(%arg0: i32, %arg1: i32, %arg2: memref<16x32xbf16, #tpu.memory_space<vmem>>, %arg3: memref<32x128xbf16, #tpu.memory_space<vmem>>, %arg4: memref<1x128xf32, #tpu.memory_space<vmem>>, %arg5: memref<128x128xbf16, #tpu.memory_space<vmem>>, %arg6: memref<1x128xf32, #tpu.memory_space<vmem>>, %arg7: memref<16x128xf32, #tpu.memory_space<vmem>>, %arg8: memref<16x128xbf16, #tpu.memory_space<vmem>>) attributes {dimension_semantics = [#tpu.dimension_semantics<parallel>, #tpu.dimension_semantics<arbitrary>], iteration_bounds = array<i64: 1, 1>, scalar_prefetch = 0 : i64, scratch_operands = 1 : i64, tpu.core_type = #tpu.core_type<tc>, window_params = [{transform_indices = @transform_0, window_bounds = array<i64: 16, 32>}, {pipeline_mode = #tpu.pipeline_mode<synchronous>, transform_indices = @transform_1, window_bounds = array<i64: 32, 128>}, {pipeline_mode = #tpu.pipeline_mode<synchronous>, transform_indices = @transform_2, window_bounds = array<i64: 1, 128>}, {pipeline_mode = #tpu.pipeline_mode<synchronous>, transform_indices = @transform_3, window_bounds = array<i64: 128, 128>}, {pipeline_mode = #tpu.pipeline_mode<synchronous>, transform_indices = @transform_4, window_bounds = array<i64: 1, 128>}, {transform_indices = @transform_5, window_bounds = array<i64: 16, 128>}]} {
    %c0_i32 = arith.constant 0 : i32
    %0 = arith.cmpi eq, %arg1, %c0_i32 : i32
    %1 = arith.extui %0 : i1 to i32
    %c0_i32_0 = arith.constant 0 : i32
    %2 = arith.cmpi ne, %1, %c0_i32_0 : i32
    scf.if %2 {
      %c0_8 = arith.constant 0 : index
      %c0_9 = arith.constant 0 : index
      %10 = vector.load %arg2[%c0_8, %c0_9] : memref<16x32xbf16, #tpu.memory_space<vmem>>, vector<16x32xbf16>
      %c0_10 = arith.constant 0 : index
      %c0_11 = arith.constant 0 : index
      %11 = vector.load %arg3[%c0_10, %c0_11] : memref<32x128xbf16, #tpu.memory_space<vmem>>, vector<32x128xbf16>
      %cst_12 = arith.constant dense<0.000000e+00> : vector<16x128xf32>
      %12 = tpu.matmul %10, %11, %cst_12 {dimension_numbers = #tpu.dot_dimension_numbers<[1], [0], [0], [1], [0, 0, 1, 1], [], []>} : vector<16x32xbf16>, vector<32x128xbf16>, vector<16x128xf32> -> vector<16x128xf32>
      %c0_13 = arith.constant 0 : index
      %c0_14 = arith.constant 0 : index
      %13 = vector.load %arg4[%c0_13, %c0_14] : memref<1x128xf32, #tpu.memory_space<vmem>>, vector<1x128xf32>
      %14 = vector.broadcast %13 : vector<1x128xf32> to vector<16x128xf32>
      %15 = arith.addf %12, %14 : vector<16x128xf32>
      %cst_15 = arith.constant 0.000000e+00 : f32
      %16 = vector.broadcast %cst_15 : f32 to vector<16x128xf32>
      %17 = arith.maximumf %15, %16 : vector<16x128xf32>
      %18 = arith.truncf %17 : vector<16x128xf32> to vector<16x128xbf16>
      %c0_16 = arith.constant 0 : index
      %c0_17 = arith.constant 0 : index
      %19 = vector.load %arg8[%c0_16, %c0_17] : memref<16x128xbf16, #tpu.memory_space<vmem>>, vector<16x128xbf16>
      tpu.vector_store %arg8[%c0_16, %c0_17], %18 {strides = array<i32>} : memref<16x128xbf16, #tpu.memory_space<vmem>>, vector<16x128xbf16>,
    } else {
    }
    %c0 = arith.constant 0 : index
    %c0_1 = arith.constant 0 : index
    %3 = vector.load %arg8[%c0, %c0_1] : memref<16x128xbf16, #tpu.memory_space<vmem>>, vector<16x128xbf16>
    %c0_2 = arith.constant 0 : index
    %c0_3 = arith.constant 0 : index
    %4 = vector.load %arg5[%c0_2, %c0_3] : memref<128x128xbf16, #tpu.memory_space<vmem>>, vector<128x128xbf16>
    %cst = arith.constant dense<0.000000e+00> : vector<16x128xf32>
    %5 = tpu.matmul %3, %4, %cst {dimension_numbers = #tpu.dot_dimension_numbers<[1], [0], [0], [1], [0, 0, 1, 1], [], []>} : vector<16x128xbf16>, vector<128x128xbf16>, vector<16x128xf32> -> vector<16x128xf32>
    %c0_4 = arith.constant 0 : index
    %c0_5 = arith.constant 0 : index
    %6 = vector.load %arg6[%c0_4, %c0_5] : memref<1x128xf32, #tpu.memory_space<vmem>>, vector<1x128xf32>
    %7 = vector.broadcast %6 : vector<1x128xf32> to vector<16x128xf32>
    %8 = arith.addf %5, %7 : vector<16x128xf32>
    %c0_6 = arith.constant 0 : index
    %c0_7 = arith.constant 0 : index
    %9 = vector.load %arg7[%c0_6, %c0_7] : memref<16x128xf32, #tpu.memory_space<vmem>>, vector<16x128xf32>
    tpu.vector_store %arg7[%c0_6, %c0_7], %8 {strides = array<i32>} : memref<16x128xf32, #tpu.memory_space<vmem>>, vector<16x128xf32>,
    return
  }
  func.func @transform_0(%arg0: i32, %arg1: i32) -> (i32, i32) {
    %c0_i32 = arith.constant 0 : i32
    %c0_i32_0 = arith.constant 0 : i32
    return %arg0, %c0_i32 : i32, i32
  }
  func.func @transform_1(%arg0: i32, %arg1: i32) -> (i32, i32) {
    %c0_i32 = arith.constant 0 : i32
    %c0_i32_0 = arith.constant 0 : i32
    %c0_i32_1 = arith.constant 0 : i32
    return %c0_i32, %c0_i32_0 : i32, i32
  }
  func.func @transform_2(%arg0: i32, %arg1: i32) -> (i32, i32) {
    %c0_i32 = arith.constant 0 : i32
    %c0_i32_0 = arith.constant 0 : i32
    %c0_i32_1 = arith.constant 0 : i32
    return %c0_i32, %c0_i32_0 : i32, i32
  }
  func.func @transform_3(%arg0: i32, %arg1: i32) -> (i32, i32) {
    %c0_i32 = arith.constant 0 : i32
    %c0_i32_0 = arith.constant 0 : i32
    return %c0_i32, %arg1 : i32, i32
  }
  func.func @transform_4(%arg0: i32, %arg1: i32) -> (i32, i32) {
    %c0_i32 = arith.constant 0 : i32
    %c0_i32_0 = arith.constant 0 : i32
    return %c0_i32, %arg1 : i32, i32
  }
  func.func @transform_5(%arg0: i32, %arg1: i32) -> (i32, i32) {
    %c0_i32 = arith.constant 0 : i32
    return %arg0, %arg1 : i32, i32
  }
}

module attributes {stable_mosaic.version = 11 : i64} {
  func.func @_projector_kernel(%arg0: i32, %arg1: i32, %arg2: memref<16x32xbf16, #tpu.memory_space<vmem>>, %arg3: memref<32x128xbf16, #tpu.memory_space<vmem>>, %arg4: memref<1x128xf32, #tpu.memory_space<vmem>>, %arg5: memref<128x128xbf16, #tpu.memory_space<vmem>>, %arg6: memref<1x128xf32, #tpu.memory_space<vmem>>, %arg7: memref<16x128xf32, #tpu.memory_space<vmem>>, %arg8: memref<16x128xbf16, #tpu.memory_space<vmem>>) attributes {dimension_semantics = [#tpu.dimension_semantics<parallel>, #tpu.dimension_semantics<arbitrary>], iteration_bounds = array<i64: 1, 1>, scalar_prefetch = 0 : i64, scratch_operands = 1 : i64, tpu.core_type = #tpu.core_type<tc>, window_params = [{transform_indices = @transform_0, window_bounds = array<i64: 16, 32>}, {pipeline_mode = #tpu.pipeline_mode<synchronous>, transform_indices = @transform_1, window_bounds = array<i64: 32, 128>}, {pipeline_mode = #tpu.pipeline_mode<synchronous>, transform_indices = @transform_2, window_bounds = array<i64: 1, 128>}, {transform_indices = @transform_3, window_bounds = array<i64: 128, 128>}, {transform_indices = @transform_4, window_bounds = array<i64: 1, 128>}, {transform_indices = @transform_5, window_bounds = array<i64: 16, 128>}]} {
    %c0_i32 = arith.constant 0 : i32
    %0 = arith.cmpi eq, %arg1, %c0_i32 : i32
    %1 = arith.extui %0 : i1 to i32
    %c0_i32_0 = arith.constant 0 : i32
    %2 = arith.cmpi ne, %1, %c0_i32_0 : i32
    scf.if %2 {
      %c0_8 = arith.constant 0 : index
      %c0_9 = arith.constant 0 : index
      %10 = vector.load %arg2[%c0_8, %c0_9] : memref<16x32xbf16, #tpu.memory_space<vmem>>, vector<16x32xbf16>
      %c0_10 = arith.constant 0 : index
      %c0_11 = arith.constant 0 : index
      %11 = vector.load %arg3[%c0_10, %c0_11] : memref<32x128xbf16, #tpu.memory_space<vmem>>, vector<32x128xbf16>
      %cst_12 = arith.constant dense<0.000000e+00> : vector<16x128xf32>
      %12 = tpu.matmul %10, %11, %cst_12 {dimension_numbers = #tpu.dot_dimension_numbers<[1], [0], [0], [1], [0, 0, 1, 1], [], []>} : vector<16x32xbf16>, vector<32x128xbf16>, vector<16x128xf32> -> vector<16x128xf32>
      %c0_13 = arith.constant 0 : index
      %c0_14 = arith.constant 0 : index
      %13 = vector.load %arg4[%c0_13, %c0_14] : memref<1x128xf32, #tpu.memory_space<vmem>>, vector<1x128xf32>
      %14 = vector.broadcast %13 : vector<1x128xf32> to vector<16x128xf32>
      %15 = arith.addf %12, %14 : vector<16x128xf32>
      %cst_15 = arith.constant 0.000000e+00 : f32
      %16 = vector.broadcast %cst_15 : f32 to vector<16x128xf32>
      %17 = arith.maximumf %15, %16 : vector<16x128xf32>
      %18 = arith.truncf %17 : vector<16x128xf32> to vector<16x128xbf16>
      %c0_16 = arith.constant 0 : index
      %c0_17 = arith.constant 0 : index
      %19 = vector.load %arg8[%c0_16, %c0_17] : memref<16x128xbf16, #tpu.memory_space<vmem>>, vector<16x128xbf16>
      tpu.vector_store %arg8[%c0_16, %c0_17], %18 {strides = array<i32>} : memref<16x128xbf16, #tpu.memory_space<vmem>>, vector<16x128xbf16>,
    } else {
    }
    %c0 = arith.constant 0 : index
    %c0_1 = arith.constant 0 : index
    %3 = vector.load %arg8[%c0, %c0_1] : memref<16x128xbf16, #tpu.memory_space<vmem>>, vector<16x128xbf16>
    %c0_2 = arith.constant 0 : index
    %c0_3 = arith.constant 0 : index
    %4 = vector.load %arg5[%c0_2, %c0_3] : memref<128x128xbf16, #tpu.memory_space<vmem>>, vector<128x128xbf16>
    %cst = arith.constant dense<0.000000e+00> : vector<16x128xf32>
    %5 = tpu.matmul %3, %4, %cst {dimension_numbers = #tpu.dot_dimension_numbers<[1], [0], [0], [1], [0, 0, 1, 1], [], []>} : vector<16x128xbf16>, vector<128x128xbf16>, vector<16x128xf32> -> vector<16x128xf32>
    %c0_4 = arith.constant 0 : index
    %c0_5 = arith.constant 0 : index
    %6 = vector.load %arg6[%c0_4, %c0_5] : memref<1x128xf32, #tpu.memory_space<vmem>>, vector<1x128xf32>
    %7 = vector.broadcast %6 : vector<1x128xf32> to vector<16x128xf32>
    %8 = arith.addf %5, %7 : vector<16x128xf32>
    %c0_6 = arith.constant 0 : index
    %c0_7 = arith.constant 0 : index
    %9 = vector.load %arg7[%c0_6, %c0_7] : memref<16x128xf32, #tpu.memory_space<vmem>>, vector<16x128xf32>
    tpu.vector_store %arg7[%c0_6, %c0_7], %8 {strides = array<i32>} : memref<16x128xf32, #tpu.memory_space<vmem>>, vector<16x128xf32>,
    return
  }
  func.func @transform_0(%arg0: i32, %arg1: i32) -> (i32, i32) {
    %c0_i32 = arith.constant 0 : i32
    %c0_i32_0 = arith.constant 0 : i32
    return %arg0, %c0_i32 : i32, i32
  }
  func.func @transform_1(%arg0: i32, %arg1: i32) -> (i32, i32) {
    %c0_i32 = arith.constant 0 : i32
    %c0_i32_0 = arith.constant 0 : i32
    %c0_i32_1 = arith.constant 0 : i32
    return %c0_i32, %c0_i32_0 : i32, i32
  }
  func.func @transform_2(%arg0: i32, %arg1: i32) -> (i32, i32) {
    %c0_i32 = arith.constant 0 : i32
    %c0_i32_0 = arith.constant 0 : i32
    %c0_i32_1 = arith.constant 0 : i32
    return %c0_i32, %c0_i32_0 : i32, i32
  }
  func.func @transform_3(%arg0: i32, %arg1: i32) -> (i32, i32) {
    %c0_i32 = arith.constant 0 : i32
    %c0_i32_0 = arith.constant 0 : i32
    return %c0_i32, %arg1 : i32, i32
  }
  func.func @transform_4(%arg0: i32, %arg1: i32) -> (i32, i32) {
    %c0_i32 = arith.constant 0 : i32
    %c0_i32_0 = arith.constant 0 : i32
    return %c0_i32, %arg1 : i32, i32
  }
  func.func @transform_5(%arg0: i32, %arg1: i32) -> (i32, i32) {
    %c0_i32 = arith.constant 0 : i32
    return %arg0, %arg1 : i32, i32
  }
}

</mosaic_0001>

<llo_original>
// kernel: _projector_apply.1
$region0: #{_projector_apply.1}
  #allocation0 [shape = 'u32[]', space=smem, size = 0x4, offset = 0x4, fixed_abs, tag = 'smem constant byte address 0x4 - core index']
  #allocation1 [shape = 'u32[144,128]{1,0:T(1,128)}', space=vmem, size = 0x12000, scoped, tag = 'internal scratch']
  #allocation2 [shape = 'bf16[16,128]{1,0:T(16,128)(2,1)}', space=vmem, size = 0x1000, scoped, tag = 'scratch operand']
  %s0 = inlined_call_operand.vmem [shape: bf16[16,32], index: 0, kind: input, shape index: {}]
  %s1 = inlined_call_operand.vmem [shape: bf16[32,128], index: 1, kind: input, shape index: {}]
  %s2 = inlined_call_operand.vmem [shape: f32[1,128], index: 2, kind: input, shape index: {}]
  %s3 = inlined_call_operand.hbm [shape: bf16[128,128], index: 3, kind: input, shape index: {}]
  %s4 = inlined_call_operand.vmem [shape: f32[1,128], index: 4, kind: input, shape index: {}]
  %s5 = inlined_call_operand.hbm [shape: f32[16,128], index: 5, kind: output, shape index: {}]
  %s6 = sld [smem:[#allocation0]]
  $region38: #{_projector_apply.1} parent=0
    _
  %s8 = ssub.s32 1, %s6
  %s9 = scalar_select 0, %s8, %s6
  $region1: #{_projector_apply.1} parent=0
    #allocation3 [shape = 'u8[32768]{0}', space=vmem, size = 0x8000, scoped, tag = 'input window, operand 3, single buffered']
    #allocation4 [shape = 's32[1]{0}', space=sflag, size = 0x4, scoped, tag = 'scoped memory for _projector_apply.1']
    #allocation5 [shape = 's32[1]{0}', space=sflag, size = 0x4, scoped, tag = 'scoped memory for _projector_apply.1']
    #allocation6 [shape = 'u8[8192]{0}', space=vmem, size = 0x2000, scoped, tag = 'output window, operand 0, single buffered']
    %10 = vsyncpa [#allocation4], 0
    %11 = vsyncpa [#allocation5], 0
    // Predicated region
    $region2: #{_projector_apply.1} parent=1 // pred_check
      _
    $region3: #{_projector_apply.1} parent=1 // pred_check_branch
      %13 = sbr.rel (0) target = $region5
    $region4: #{_projector_apply.1} parent=1 // pred_region
      _
    $region5: #{_projector_apply.1} parent=1 // pred_fallthru
      _
    // Predicated region
    $region6: #{_projector_apply.1} parent=1 // pred_check
      _
    $region7: #{_projector_apply.1} parent=1 // pred_check_branch
      %15 = sbr.rel (0) target = $region9
    $region8: #{_projector_apply.1} parent=1 // pred_region
      _
    $region9: #{_projector_apply.1} parent=1 // pred_fallthru
      _
    // Predicated region
    $region10: #{_projector_apply.1} parent=1 // pred_check
      _
    $region11: #{_projector_apply.1} parent=1 // pred_check_branch
      %17 = sbr.rel (0) target = $region13
    $region12: #{_projector_apply.1} parent=1 // pred_region
      _
    $region13: #{_projector_apply.1} parent=1 // pred_fallthru
      _
    // Predicated region
    $region14: #{_projector_apply.1} parent=1 // pred_check
      _
    $region15: #{_projector_apply.1} parent=1 // pred_check_branch
      %19 = sbr.rel (0) target = $region17
    $region16: #{_projector_apply.1} parent=1 // pred_region
      %s21 = ssub.s32 1024, 1024
      %22 = vsyncadd [#allocation4], %s21
      %s23 = sshll.u32 [#allocation3], 4
      %s24 = int_to_ptr.vmem [resolvable:$true] %s23
      %29 = dma.hbm_to_vmem [thread:$0]  %s3, 1024, %s24, [#allocation4], 64, 64, 4
    $region17: #{_projector_apply.1} parent=1 // pred_fallthru
      _
    // Predicated region
    $region18: #{_projector_apply.1} parent=1 // pred_check
      _
    $region19: #{_projector_apply.1} parent=1 // pred_check_branch
      %31 = sbr.rel (0) target = $region21
    $region20: #{_projector_apply.1} parent=1 // pred_region
      _
    $region21: #{_projector_apply.1} parent=1 // pred_fallthru
      _
    // Predicated region
    $region22: #{_projector_apply.1} parent=1 // pred_check
      _
    $region23: #{_projector_apply.1} parent=1 // pred_check_branch
      %33 = sbr.rel (0) target = $region25
    $region24: #{_projector_apply.1} parent=1 // pred_region
      %34 = dma.done [#allocation4], 1024
    $region25: #{_projector_apply.1} parent=1 // pred_fallthru
      _
    %p36 = scmp.eq.s32.totalorder 0, 0
    // Predicated region
    $region26: #{_projector_apply.1} parent=1 // pred_check
      %p37 = pneg %p36
    $region27: #{_projector_apply.1} parent=1 // pred_check_branch
      %39 = sbr.rel (%p37) target = $region29
    $region28: #{_projector_apply.1} parent=1 // pred_region
      %v40 = vld [vmem:[%s0] sm:$0xf]
      %v41 = vld [vmem:[%s0 + $0x4] sm:$0xf]
      %v42 = vld [vmem:[%s1] sm:$0xf]
      %v43 = vld [vmem:[%s1 + $0x4] sm:$0xf]
      %v44 = vld [vmem:[%s1 + $0x8] sm:$0xf]
      %v45 = vld [vmem:[%s1 + $0xc] sm:$0xf]
      %v46 = vld [vmem:[%s2] sm:$0x1]
      %v48 = vlaneseq
      %v49 = vshrl.u32 %v48, 7
      %v50 = vsub.s32 0, %v49
      %v51 = vrot.slane %v46, %v50
      %v55 = vunpack.c.l.b16 %v40
      %v56 = vunpack.c.l.b16 %v41
      %v57 = vpack.c.b16 %v56, %v55
      %v62 = vunpack.c.l.b16 %v42
      %v63 = vunpack.c.l.b16 %v43
      %v64 = vunpack.c.l.b16 %v44
      %v65 = vunpack.c.l.b16 %v45
      %v66 = vpack.c.b16 %v63, %v62
      %v67 = vpack.c.b16 %v65, %v64
      %vm70 = vcmask 261120
      %v72 = vsel %vm70, %v57, 0
      %74 = vmatprep.subr.bf16.mxu0 0
      %75 = vmatpush1.bf16.msra.mxu0 %v66
      %76 = vmatprep.subr.bf16.mxu0 0
      %77 = vmatpush1.bf16.msra.mxu0 %v67
      %78 = vmatprep.subr.bf16.mxu0 0
      %79 = vmatpush1.bf16.msra.mxu0 0
      %80 = vmatprep.subr.bf16.mxu0 0
      %81 = vmatpush1.bf16.msra.mxu0 0
      %82 = vmatprep.subr.bf16.mxu0 0
      %83 = vmatpush1.bf16.msra.mxu0 0
      %84 = vmatprep.subr.bf16.mxu0 0
      %85 = vmatpush1.bf16.msra.mxu0 0
      %86 = vmatprep.subr.bf16.mxu0 0
      %87 = vmatpush1.bf16.msra.mxu0 0
      %88 = vmatprep.subr.bf16.mxu0 0
      %89 = vmatpush1.bf16.msra.mxu0 0
      %90 = vmatprep.subr.bf16.mxu0 0
      %91 = vmatpush1.bf16.msra.mxu0 0
      %92 = vmatprep.subr.bf16.mxu0 0
      %93 = vmatpush1.bf16.msra.mxu0 0
      %94 = vmatprep.subr.bf16.mxu0 0
      %95 = vmatpush1.bf16.msra.mxu0 0
      %96 = vmatprep.subr.bf16.mxu0 0
      %97 = vmatpush1.bf16.msra.mxu0 0
      %98 = vmatprep.subr.bf16.mxu0 0
      %99 = vmatpush1.bf16.msra.mxu0 0
      %100 = vmatprep.subr.bf16.mxu0 0
      %101 = vmatpush1.bf16.msra.mxu0 0
      %102 = vmatprep.subr.bf16.mxu0 0
      %103 = vmatpush1.bf16.msra.mxu0 0
      %104 = vmatprep.subr.bf16.mxu0 0
      %105 = vmatpush1.bf16.msra.mxu0 0
      %106 = vmatprep.mubr.bf16.mxu0 0
      %107 = vmatmul.mubr.bf16.gmra.mrb[0].mxu0 %v72
      %v108 = vpop.f32.mrb[0].mxu0
      %v109 = vadd.f32 %v51, %v108
      %v110 = vpop.f32.mrb[0].mxu0
      %v111 = vpop.f32.mrb[0].mxu0
      %v112 = vadd.f32 %v51, %v111
      %v113 = vpop.f32.mrb[0].mxu0
      %114 = vdwg.mxu0
      %v115 = vmax.f32 %v109, 0.0
      %v116 = vmax.f32 %v112, 0.0
      %v117 = vpack.c.bf16 %v116, %v115
      %118 = vst [vmem:[#allocation2] sm:$0xff] %v117
    $region29: #{_projector_apply.1} parent=1 // pred_fallthru
      _
    %v119 = vld [vmem:[#allocation2] sm:$0xff]
    %v120 = vld [vmem:[#allocation3] sm:$0xf]
    %v121 = vld [vmem:[#allocation3 + $0x4] sm:$0xf]
    %v122 = vld [vmem:[#allocation3 + $0x8] sm:$0xf]
    %v123 = vld [vmem:[#allocation3 + $0xc] sm:$0xf]
    %v124 = vld [vmem:[#allocation3 + $0x10] sm:$0xf]
    %v125 = vld [vmem:[#allocation3 + $0x14] sm:$0xf]
    %v126 = vld [vmem:[#allocation3 + $0x18] sm:$0xf]
    %v127 = vld [vmem:[#allocation3 + $0x1c] sm:$0xf]
    %v128 = vld [vmem:[#allocation3 + $0x20] sm:$0xf]
    %v129 = vld [vmem:[#allocation3 + $0x24] sm:$0xf]
    %v130 = vld [vmem:[#allocation3 + $0x28] sm:$0xf]
    %v131 = vld [vmem:[#allocation3 + $0x2c] sm:$0xf]
    %v132 = vld [vmem:[#allocation3 + $0x30] sm:$0xf]
    %v133 = vld [vmem:[#allocation3 + $0x34] sm:$0xf]
    %v134 = vld [vmem:[#allocation3 + $0x38] sm:$0xf]
    %v135 = vld [vmem:[#allocation3 + $0x3c] sm:$0xf]
    %v136 = vld [vmem:[%s4] sm:$0x1]
    %v138 = vlaneseq
    %v139 = vshrl.u32 %v138, 7
    %v140 = vsub.s32 0, %v139
    %v141 = vrot.slane %v136, %v140
    %v159 = vunpack.c.l.b16 %v120
    %v160 = vunpack.c.l.b16 %v121
    %v161 = vunpack.c.l.b16 %v122
    %v162 = vunpack.c.l.b16 %v123
    %v163 = vunpack.c.l.b16 %v124
    %v164 = vunpack.c.l.b16 %v125
    %v165 = vunpack.c.l.b16 %v126
    %v166 = vunpack.c.l.b16 %v127
    %v167 = vunpack.c.l.b16 %v128
    %v168 = vunpack.c.l.b16 %v129
    %v169 = vunpack.c.l.b16 %v130
    %v170 = vunpack.c.l.b16 %v131
    %v171 = vunpack.c.l.b16 %v132
    %v172 = vunpack.c.l.b16 %v133
    %v173 = vunpack.c.l.b16 %v134
    %v174 = vunpack.c.l.b16 %v135
    %v175 = vpack.c.b16 %v160, %v159
    %v176 = vpack.c.b16 %v162, %v161
    %v177 = vpack.c.b16 %v164, %v163
    %v178 = vpack.c.b16 %v166, %v165
    %v179 = vpack.c.b16 %v168, %v167
    %v180 = vpack.c.b16 %v170, %v169
    %v181 = vpack.c.b16 %v172, %v171
    %v182 = vpack.c.b16 %v174, %v173
    %191 = vmatprep.subr.bf16.mxu0 0
    %192 = vmatpush1.bf16.msra.mxu0 %v175
    %193 = vmatprep.subr.bf16.mxu0 0
    %194 = vmatpush1.bf16.msra.mxu0 %v176
    %195 = vmatprep.subr.bf16.mxu0 0
    %196 = vmatpush1.bf16.msra.mxu0 %v177
    %197 = vmatprep.subr.bf16.mxu0 0
    %198 = vmatpush1.bf16.msra.mxu0 %v178
    %199 = vmatprep.subr.bf16.mxu0 0
    %200 = vmatpush1.bf16.msra.mxu0 %v179
    %201 = vmatprep.subr.bf16.mxu0 0
    %202 = vmatpush1.bf16.msra.mxu0 %v180
    %203 = vmatprep.subr.bf16.mxu0 0
    %204 = vmatpush1.bf16.msra.mxu0 %v181
    %205 = vmatprep.subr.bf16.mxu0 0
    %206 = vmatpush1.bf16.msra.mxu0 %v182
    %207 = vmatprep.subr.bf16.mxu0 0
    %208 = vmatpush1.bf16.msra.mxu0 0
    %209 = vmatprep.subr.bf16.mxu0 0
    %210 = vmatpush1.bf16.msra.mxu0 0
    %211 = vmatprep.subr.bf16.mxu0 0
    %212 = vmatpush1.bf16.msra.mxu0 0
    %213 = vmatprep.subr.bf16.mxu0 0
    %214 = vmatpush1.bf16.msra.mxu0 0
    %215 = vmatprep.subr.bf16.mxu0 0
    %216 = vmatpush1.bf16.msra.mxu0 0
    %217 = vmatprep.subr.bf16.mxu0 0
    %218 = vmatpush1.bf16.msra.mxu0 0
    %219 = vmatprep.subr.bf16.mxu0 0
    %220 = vmatpush1.bf16.msra.mxu0 0
    %221 = vmatprep.subr.bf16.mxu0 0
    %222 = vmatpush1.bf16.msra.mxu0 0
    %223 = vmatprep.mubr.bf16.mxu0 0
    %224 = vmatmul.mubr.bf16.gmra.mrb[0].mxu0 %v119
    %v225 = vpop.f32.mrb[0].mxu0
    %v226 = vadd.f32 %v141, %v225
    %v227 = vpop.f32.mrb[0].mxu0
    %v228 = vpop.f32.mrb[0].mxu0
    %v229 = vadd.f32 %v141, %v228
    %v230 = vpop.f32.mrb[0].mxu0
    %231 = vdwg.mxu0
    %232 = vst [vmem:[#allocation6] sm:$0xff] %v226
    %233 = vst [vmem:[#allocation6 + $0x8] sm:$0xff] %v229
    // Predicated region
    $region30: #{_projector_apply.1} parent=1 // pred_check
      _
    $region31: #{_projector_apply.1} parent=1 // pred_check_branch
      %235 = sbr.rel (0) target = $region33
    $region32: #{_projector_apply.1} parent=1 // pred_region
      %s237 = ssub.s32 256, 256
      %238 = vsyncadd [#allocation5], %s237
      %s239 = sshll.u32 [#allocation6], 4
      %s240 = int_to_ptr.vmem [resolvable:$true] %s239
      %245 = dma.vmem_to_hbm [thread:$0]  %s240, 256, %s5, [#allocation5], 128, 128, 8
    $region33: #{_projector_apply.1} parent=1 // pred_fallthru
      _
    // Predicated region
    $region34: #{_projector_apply.1} parent=1 // pred_check
      _
    $region35: #{_projector_apply.1} parent=1 // pred_check_branch
      %247 = sbr.rel (0) target = $region37
    $region36: #{_projector_apply.1} parent=1 // pred_region
      %248 = dma.done [#allocation5], 256
    $region37: #{_projector_apply.1} parent=1 // pred_fallthru
      _
    %249 = vsyncpa [#allocation4], 1
    %250 = vsyncpa [#allocation5], 1

// kernel: _projector_apply.1
$region0: #{_projector_apply.1}
  #allocation0 [shape = 'u32[]', space=smem, size = 0x4, offset = 0x4, fixed_abs, tag = 'smem constant byte address 0x4 - core index']
  #allocation1 [shape = 'u32[144,128]{1,0:T(1,128)}', space=vmem, size = 0x12000, scoped, tag = 'internal scratch']
  #allocation2 [shape = 'bf16[16,128]{1,0:T(16,128)(2,1)}', space=vmem, size = 0x1000, scoped, tag = 'scratch operand']
  %s0 = inlined_call_operand.vmem [shape: bf16[16,32], index: 0, kind: input, shape index: {}]
  %s1 = inlined_call_operand.vmem [shape: bf16[32,128], index: 1, kind: input, shape index: {}]
  %s2 = inlined_call_operand.vmem [shape: f32[1,128], index: 2, kind: input, shape index: {}]
  %s3 = inlined_call_operand.hbm [shape: bf16[128,128], index: 3, kind: input, shape index: {}]
  %s4 = inlined_call_operand.vmem [shape: f32[1,128], index: 4, kind: input, shape index: {}]
  %s5 = inlined_call_operand.hbm [shape: f32[16,128], index: 5, kind: output, shape index: {}]
  %s6 = sld [smem:[#allocation0]]
  $region38: #{_projector_apply.1} parent=0
    _
  %s8 = ssub.s32 1, %s6
  %s9 = scalar_select 0, %s8, %s6
  $region1: #{_projector_apply.1} parent=0
    #allocation3 [shape = 'u8[32768]{0}', space=vmem, size = 0x8000, scoped, tag = 'input window, operand 3, single buffered']
    #allocation4 [shape = 's32[1]{0}', space=sflag, size = 0x4, scoped, tag = 'scoped memory for _projector_apply.1']
    #allocation5 [shape = 's32[1]{0}', space=sflag, size = 0x4, scoped, tag = 'scoped memory for _projector_apply.1']
    #allocation6 [shape = 'u8[8192]{0}', space=vmem, size = 0x2000, scoped, tag = 'output window, operand 0, single buffered']
    %10 = vsyncpa [#allocation4], 0
    %11 = vsyncpa [#allocation5], 0
    // Predicated region
    $region2: #{_projector_apply.1} parent=1 // pred_check
      _
    $region3: #{_projector_apply.1} parent=1 // pred_check_branch
      %13 = sbr.rel (0) target = $region5
    $region4: #{_projector_apply.1} parent=1 // pred_region
      _
    $region5: #{_projector_apply.1} parent=1 // pred_fallthru
      _
    // Predicated region
    $region6: #{_projector_apply.1} parent=1 // pred_check
      _
    $region7: #{_projector_apply.1} parent=1 // pred_check_branch
      %15 = sbr.rel (0) target = $region9
    $region8: #{_projector_apply.1} parent=1 // pred_region
      _
    $region9: #{_projector_apply.1} parent=1 // pred_fallthru
      _
    // Predicated region
    $region10: #{_projector_apply.1} parent=1 // pred_check
      _
    $region11: #{_projector_apply.1} parent=1 // pred_check_branch
      %17 = sbr.rel (0) target = $region13
    $region12: #{_projector_apply.1} parent=1 // pred_region
      _
    $region13: #{_projector_apply.1} parent=1 // pred_fallthru
      _
    // Predicated region
    $region14: #{_projector_apply.1} parent=1 // pred_check
      _
    $region15: #{_projector_apply.1} parent=1 // pred_check_branch
      %19 = sbr.rel (0) target = $region17
    $region16: #{_projector_apply.1} parent=1 // pred_region
      %s21 = ssub.s32 1024, 1024
      %22 = vsyncadd [#allocation4], %s21
      %s23 = sshll.u32 [#allocation3], 4
      %s24 = int_to_ptr.vmem [resolvable:$true] %s23
      %29 = dma.hbm_to_vmem [thread:$0]  %s3, 1024, %s24, [#allocation4], 64, 64, 4
    $region17: #{_projector_apply.1} parent=1 // pred_fallthru
      _
    // Predicated region
    $region18: #{_projector_apply.1} parent=1 // pred_check
      _
    $region19: #{_projector_apply.1} parent=1 // pred_check_branch
      %31 = sbr.rel (0) target = $region21
    $region20: #{_projector_apply.1} parent=1 // pred_region
      _
    $region21: #{_projector_apply.1} parent=1 // pred_fallthru
      _
    // Predicated region
    $region22: #{_projector_apply.1} parent=1 // pred_check
      _
    $region23: #{_projector_apply.1} parent=1 // pred_check_branch
      %33 = sbr.rel (0) target = $region25
    $region24: #{_projector_apply.1} parent=1 // pred_region
      %34 = dma.done [#allocation4], 1024
    $region25: #{_projector_apply.1} parent=1 // pred_fallthru
      _
    %p36 = scmp.eq.s32.totalorder 0, 0
    // Predicated region
    $region26: #{_projector_apply.1} parent=1 // pred_check
      %p37 = pneg %p36
    $region27: #{_projector_apply.1} parent=1 // pred_check_branch
      %39 = sbr.rel (%p37) target = $region29
    $region28: #{_projector_apply.1} parent=1 // pred_region
      %v40 = vld [vmem:[%s0] sm:$0xf]
      %v41 = vld [vmem:[%s0 + $0x4] sm:$0xf]
      %v42 = vld [vmem:[%s1] sm:$0xf]
      %v43 = vld [vmem:[%s1 + $0x4] sm:$0xf]
      %v44 = vld [vmem:[%s1 + $0x8] sm:$0xf]
      %v45 = vld [vmem:[%s1 + $0xc] sm:$0xf]
      %v46 = vld [vmem:[%s2] sm:$0x1]
      %v48 = vlaneseq
      %v49 = vshrl.u32 %v48, 7
      %v50 = vsub.s32 0, %v49
      %v51 = vrot.slane %v46, %v50
      %v55 = vunpack.c.l.b16 %v40
      %v56 = vunpack.c.l.b16 %v41
      %v57 = vpack.c.b16 %v56, %v55
      %v62 = vunpack.c.l.b16 %v42
      %v63 = vunpack.c.l.b16 %v43
      %v64 = vunpack.c.l.b16 %v44
      %v65 = vunpack.c.l.b16 %v45
      %v66 = vpack.c.b16 %v63, %v62
      %v67 = vpack.c.b16 %v65, %v64
      %vm70 = vcmask 261120
      %v72 = vsel %vm70, %v57, 0
      %74 = vmatprep.subr.bf16.mxu0 0
      %75 = vmatpush1.bf16.msra.mxu0 %v66
      %76 = vmatprep.subr.bf16.mxu0 0
      %77 = vmatpush1.bf16.msra.mxu0 %v67
      %78 = vmatprep.subr.bf16.mxu0 0
      %79 = vmatpush1.bf16.msra.mxu0 0
      %80 = vmatprep.subr.bf16.mxu0 0
      %81 = vmatpush1.bf16.msra.mxu0 0
      %82 = vmatprep.subr.bf16.mxu0 0
      %83 = vmatpush1.bf16.msra.mxu0 0
      %84 = vmatprep.subr.bf16.mxu0 0
      %85 = vmatpush1.bf16.msra.mxu0 0
      %86 = vmatprep.subr.bf16.mxu0 0
      %87 = vmatpush1.bf16.msra.mxu0 0
      %88 = vmatprep.subr.bf16.mxu0 0
      %89 = vmatpush1.bf16.msra.mxu0 0
      %90 = vmatprep.subr.bf16.mxu0 0
      %91 = vmatpush1.bf16.msra.mxu0 0
      %92 = vmatprep.subr.bf16.mxu0 0
      %93 = vmatpush1.bf16.msra.mxu0 0
      %94 = vmatprep.subr.bf16.mxu0 0
      %95 = vmatpush1.bf16.msra.mxu0 0
      %96 = vmatprep.subr.bf16.mxu0 0
      %97 = vmatpush1.bf16.msra.mxu0 0
      %98 = vmatprep.subr.bf16.mxu0 0
      %99 = vmatpush1.bf16.msra.mxu0 0
      %100 = vmatprep.subr.bf16.mxu0 0
      %101 = vmatpush1.bf16.msra.mxu0 0
      %102 = vmatprep.subr.bf16.mxu0 0
      %103 = vmatpush1.bf16.msra.mxu0 0
      %104 = vmatprep.subr.bf16.mxu0 0
      %105 = vmatpush1.bf16.msra.mxu0 0
      %106 = vmatprep.mubr.bf16.mxu0 0
      %107 = vmatmul.mubr.bf16.gmra.mrb[0].mxu0 %v72
      %v108 = vpop.f32.mrb[0].mxu0
      %v109 = vadd.f32 %v51, %v108
      %v110 = vpop.f32.mrb[0].mxu0
      %v111 = vpop.f32.mrb[0].mxu0
      %v112 = vadd.f32 %v51, %v111
      %v113 = vpop.f32.mrb[0].mxu0
      %114 = vdwg.mxu0
      %v115 = vmax.f32 %v109, 0.0
      %v116 = vmax.f32 %v112, 0.0
      %v117 = vpack.c.bf16 %v116, %v115
      %118 = vst [vmem:[#allocation2] sm:$0xff] %v117
    $region29: #{_projector_apply.1} parent=1 // pred_fallthru
      _
    %v119 = vld [vmem:[#allocation2] sm:$0xff]
    %v120 = vld [vmem:[#allocation3] sm:$0xf]
    %v121 = vld [vmem:[#allocation3 + $0x4] sm:$0xf]
    %v122 = vld [vmem:[#allocation3 + $0x8] sm:$0xf]
    %v123 = vld [vmem:[#allocation3 + $0xc] sm:$0xf]
    %v124 = vld [vmem:[#allocation3 + $0x10] sm:$0xf]
    %v125 = vld [vmem:[#allocation3 + $0x14] sm:$0xf]
    %v126 = vld [vmem:[#allocation3 + $0x18] sm:$0xf]
    %v127 = vld [vmem:[#allocation3 + $0x1c] sm:$0xf]
    %v128 = vld [vmem:[#allocation3 + $0x20] sm:$0xf]
    %v129 = vld [vmem:[#allocation3 + $0x24] sm:$0xf]
    %v130 = vld [vmem:[#allocation3 + $0x28] sm:$0xf]
    %v131 = vld [vmem:[#allocation3 + $0x2c] sm:$0xf]
    %v132 = vld [vmem:[#allocation3 + $0x30] sm:$0xf]
    %v133 = vld [vmem:[#allocation3 + $0x34] sm:$0xf]
    %v134 = vld [vmem:[#allocation3 + $0x38] sm:$0xf]
    %v135 = vld [vmem:[#allocation3 + $0x3c] sm:$0xf]
    %v136 = vld [vmem:[%s4] sm:$0x1]
    %v138 = vlaneseq
    %v139 = vshrl.u32 %v138, 7
    %v140 = vsub.s32 0, %v139
    %v141 = vrot.slane %v136, %v140
    %v159 = vunpack.c.l.b16 %v120
    %v160 = vunpack.c.l.b16 %v121
    %v161 = vunpack.c.l.b16 %v122
    %v162 = vunpack.c.l.b16 %v123
    %v163 = vunpack.c.l.b16 %v124
    %v164 = vunpack.c.l.b16 %v125
    %v165 = vunpack.c.l.b16 %v126
    %v166 = vunpack.c.l.b16 %v127
    %v167 = vunpack.c.l.b16 %v128
    %v168 = vunpack.c.l.b16 %v129
    %v169 = vunpack.c.l.b16 %v130
    %v170 = vunpack.c.l.b16 %v131
    %v171 = vunpack.c.l.b16 %v132
    %v172 = vunpack.c.l.b16 %v133
    %v173 = vunpack.c.l.b16 %v134
    %v174 = vunpack.c.l.b16 %v135
    %v175 = vpack.c.b16 %v160, %v159
    %v176 = vpack.c.b16 %v162, %v161
    %v177 = vpack.c.b16 %v164, %v163
    %v178 = vpack.c.b16 %v166, %v165
    %v179 = vpack.c.b16 %v168, %v167
    %v180 = vpack.c.b16 %v170, %v169
    %v181 = vpack.c.b16 %v172, %v171
    %v182 = vpack.c.b16 %v174, %v173
    %191 = vmatprep.subr.bf16.mxu0 0
    %192 = vmatpush1.bf16.msra.mxu0 %v175
    %193 = vmatprep.subr.bf16.mxu0 0
    %194 = vmatpush1.bf16.msra.mxu0 %v176
    %195 = vmatprep.subr.bf16.mxu0 0
    %196 = vmatpush1.bf16.msra.mxu0 %v177
    %197 = vmatprep.subr.bf16.mxu0 0
    %198 = vmatpush1.bf16.msra.mxu0 %v178
    %199 = vmatprep.subr.bf16.mxu0 0
    %200 = vmatpush1.bf16.msra.mxu0 %v179
    %201 = vmatprep.subr.bf16.mxu0 0
    %202 = vmatpush1.bf16.msra.mxu0 %v180
    %203 = vmatprep.subr.bf16.mxu0 0
    %204 = vmatpush1.bf16.msra.mxu0 %v181
    %205 = vmatprep.subr.bf16.mxu0 0
    %206 = vmatpush1.bf16.msra.mxu0 %v182
    %207 = vmatprep.subr.bf16.mxu0 0
    %208 = vmatpush1.bf16.msra.mxu0 0
    %209 = vmatprep.subr.bf16.mxu0 0
    %210 = vmatpush1.bf16.msra.mxu0 0
    %211 = vmatprep.subr.bf16.mxu0 0
    %212 = vmatpush1.bf16.msra.mxu0 0
    %213 = vmatprep.subr.bf16.mxu0 0
    %214 = vmatpush1.bf16.msra.mxu0 0
    %215 = vmatprep.subr.bf16.mxu0 0
    %216 = vmatpush1.bf16.msra.mxu0 0
    %217 = vmatprep.subr.bf16.mxu0 0
    %218 = vmatpush1.bf16.msra.mxu0 0
    %219 = vmatprep.subr.bf16.mxu0 0
    %220 = vmatpush1.bf16.msra.mxu0 0
    %221 = vmatprep.subr.bf16.mxu0 0
    %222 = vmatpush1.bf16.msra.mxu0 0
    %223 = vmatprep.mubr.bf16.mxu0 0
    %224 = vmatmul.mubr.bf16.gmra.mrb[0].mxu0 %v119
    %v225 = vpop.f32.mrb[0].mxu0
    %v226 = vadd.f32 %v141, %v225
    %v227 = vpop.f32.mrb[0].mxu0
    %v228 = vpop.f32.mrb[0].mxu0
    %v229 = vadd.f32 %v141, %v228
    %v230 = vpop.f32.mrb[0].mxu0
    %231 = vdwg.mxu0
    %232 = vst [vmem:[#allocation6] sm:$0xff] %v226
    %233 = vst [vmem:[#allocation6 + $0x8] sm:$0xff] %v229
    // Predicated region
    $region30: #{_projector_apply.1} parent=1 // pred_check
      _
    $region31: #{_projector_apply.1} parent=1 // pred_check_branch
      %235 = sbr.rel (0) target = $region33
    $region32: #{_projector_apply.1} parent=1 // pred_region
      %s237 = ssub.s32 256, 256
      %238 = vsyncadd [#allocation5], %s237
      %s239 = sshll.u32 [#allocation6], 4
      %s240 = int_to_ptr.vmem [resolvable:$true] %s239
      %245 = dma.vmem_to_hbm [thread:$0]  %s240, 256, %s5, [#allocation5], 128, 128, 8
    $region33: #{_projector_apply.1} parent=1 // pred_fallthru
      _
    // Predicated region
    $region34: #{_projector_apply.1} parent=1 // pred_check
      _
    $region35: #{_projector_apply.1} parent=1 // pred_check_branch
      %247 = sbr.rel (0) target = $region37
    $region36: #{_projector_apply.1} parent=1 // pred_region
      %248 = dma.done [#allocation5], 256
    $region37: #{_projector_apply.1} parent=1 // pred_fallthru
      _
    %249 = vsyncpa [#allocation4], 1
    %250 = vsyncpa [#allocation5], 1

</llo_original>
